<compile_context>
chip_gen: v5e
topology: v5e:2x2
jax: 0.10.0
libtpu: 0.0.40
codegen_flags: <defaults>
</compile_context>

<pallas_src>
import functools
import math

import jax
import jax.numpy as jnp
from jax.experimental import pallas as pl
from jax.experimental.pallas import tpu as pltpu


def _encoder_stack_kernel(x_ref, wqkv_ref, wo_ref, xs_ref, *attn_refs,
                          d_model, seq, bt, lens, offs, fuse_qkv):
    """One grid step = (batch tile b, encoder e).

    x_ref     : (bt, L, D)          full-sequence activations (resident across e)
    wqkv_ref  : (1, D, 3D) if fuse_qkv else (1, 3, D, D)   per-encoder weights
    wo_ref    : (1, D, D)
    xs_ref    : (bt, sum(lens), D)  concatenated output (resident across e)
    attn_refs : per-encoder (bt, L_i, L_i) attention maps
    """
    e = pl.program_id(1)
    x_full = x_ref[...]                       # input dtype; no blanket f32 upcast
    scale = 1.0 / math.sqrt(d_model)

    for i, (li, off) in enumerate(zip(lens, offs)):
        @pl.when(e == i)
        def _(i=i, li=li, off=off):
            xs = x_full[:, seq - li:, :]                 # static suffix slice (bt, li, D)
            x2 = xs.reshape(bt * li, d_model)

            if fuse_qkv:
                # lane-aligned D: one wide MXU push, cheap aligned static slices
                qkv = jnp.dot(x2, wqkv_ref[0, :, :],
                              preferred_element_type=jnp.float32)
                q = qkv[:, 0:d_model]
                k = qkv[:, d_model:2 * d_model]
                v = qkv[:, 2 * d_model:3 * d_model]
            else:
                # lane-unaligned D: three dots (avoids XLU relayout per slice)
                q = jnp.dot(x2, wqkv_ref[0, 0, :, :],
                            preferred_element_type=jnp.float32)
                k = jnp.dot(x2, wqkv_ref[0, 1, :, :],
                            preferred_element_type=jnp.float32)
                v = jnp.dot(x2, wqkv_ref[0, 2, :, :],
                            preferred_element_type=jnp.float32)

            qb = q.reshape(bt, li, d_model)
            kb = k.reshape(bt, li, d_model)
            vb = v.reshape(bt, li, d_model)

            # TODO(synk): flash-style KV tiling for large L (O(bt*L*tk) footprint).
            s = jnp.einsum("bqd,bkd->bqk", qb, kb,
                           preferred_element_type=jnp.float32) * scale
            m = jnp.max(s, axis=-1, keepdims=True)
            p = jnp.exp(s - m)
            denom = jnp.sum(p, axis=-1, keepdims=True)
            inv = pl.reciprocal(denom, approx=True)      # EUP slot (otherwise idle)
            inv = inv * (2.0 - denom * inv)              # one Newton step -> ~f32 exact
            attn = p * inv                               # (bt, li, li), f32

            ctx = jnp.einsum("bqk,bkd->bqd", attn, vb,
                             preferred_element_type=jnp.float32)
            out = jnp.dot(ctx.reshape(bt * li, d_model), wo_ref[0, :, :],
                          preferred_element_type=jnp.float32)
            out = out.reshape(bt, li, d_model)

            # residual; write directly into the pre-offset slice of the concat output
            xs_ref[:, off:off + li, :] = (
                xs.astype(jnp.float32) + out).astype(xs_ref.dtype)
            attn_refs[i][...] = attn.astype(attn_refs[i].dtype)


def _physical_vmem_bytes():
    try:
        return int(pltpu.get_tpu_info().vmem_capacity_bytes)
    except Exception:
        return 64 << 20          # conservative fallback: v7x's 64 MiB


def _choose_batch_tile(batch, seq, vmem_bytes):
    """Batch tile: big flattened-M on big-VMEM chips, >=2 parallel steps for v7x."""
    target_rows = 512 if vmem_bytes >= (100 << 20) else 256
    bt = min(batch, max(1, -(-target_rows // seq)))
    if batch >= 2:
        bt = min(bt, batch // 2)     # keep >=2 steps on the parallel axis (2 TCs)
    bt = max(bt, 1)
    while batch % bt != 0:
        bt -= 1
    return bt


def _vmem_limit_bytes(bt, seq, d_model, lens, total_len,
                      in_itemsize, attn_itemsize, vmem_phys):
    """Estimate everything resident per step; cap at 0.8x physical VMEM."""
    lmax = max(lens)
    f32 = 4
    blocks = 2 * (bt * seq * d_model * in_itemsize                # x block
                  + 4 * d_model * d_model * in_itemsize           # wqkv + wo
                  + bt * total_len * d_model * in_itemsize        # x_stack out
                  + sum(bt * l * l for l in lens) * attn_itemsize)
    interm = (3 * bt * lmax * d_model * f32        # q, k, v
              + 3 * bt * lmax * lmax * f32         # s, p, attn
              + 2 * bt * lmax * d_model * f32)     # ctx, out
    need = blocks + interm + (4 << 20)             # headroom
    if need <= (24 << 20):
        return None                                # default scoped limit suffices
    return min(int(0.8 * vmem_phys), need)


def encoder_stack_forward(x, params, inp_lens, attn_dtype=jnp.bfloat16):
    """JAX/Pallas equivalent of EncoderStack.forward, fused into one pallas_call.

    x: (B, L, D). params: list of (wq, wk, wv, wo), each (D, D), per encoder.
    inp_lens: tuple of ints; encoder i sees x[:, -L // 2**inp_lens[i]:, :].
    Returns (x_stack, attns); x_stack is the seq-dim concatenation.
    """
    # TODO(synk): attn_mask argument of the original module is not supported.
    B, L, D = x.shape
    n_enc = len(inp_lens)
    lens = tuple(L // (2 ** i) for i in inp_lens)
    offs = tuple(int(sum(lens[:i])) for i in range(n_enc))
    total_len = int(sum(lens))

    fuse_qkv = (D % 128 == 0)
    if fuse_qkv:
        wqkv = jnp.stack([jnp.concatenate([wq, wk, wv], axis=1)
                          for (wq, wk, wv, _) in params])          # (n_enc, D, 3D)
        wqkv_block = (1, D, 3 * D)
    else:
        wqkv = jnp.stack([jnp.stack([wq, wk, wv], axis=0)
                          for (wq, wk, wv, _) in params])          # (n_enc, 3, D, D)
        wqkv_block = (1, 3, D, D)
    wo = jnp.stack([p[3] for p in params])                          # (n_enc, D, D)

    vmem_phys = _physical_vmem_bytes()
    bt = _choose_batch_tile(B, L, vmem_phys)
    vmem_limit = _vmem_limit_bytes(
        bt, L, D, lens, total_len,
        jnp.dtype(x.dtype).itemsize, jnp.dtype(attn_dtype).itemsize, vmem_phys)

    kernel = functools.partial(
        _encoder_stack_kernel, d_model=D, seq=L, bt=bt,
        lens=lens, offs=offs, fuse_qkv=fuse_qkv)

    out_shape = ((jax.ShapeDtypeStruct((B, total_len, D), x.dtype),)
                 + tuple(jax.ShapeDtypeStruct((B, li, li), attn_dtype)
                         for li in lens))
    out_specs = ((pl.BlockSpec((bt, total_len, D), lambda b, e: (b, 0, 0)),)
                 + tuple(pl.BlockSpec((bt, li, li), lambda b, e: (b, 0, 0))
                         for li in lens))
    in_specs = [
        pl.BlockSpec((bt, L, D), lambda b, e: (b, 0, 0)),   # x, resident across e
        pl.BlockSpec(wqkv_block,
                     lambda b, e: (e,) + (0,) * (len(wqkv_block) - 1)),
        pl.BlockSpec((1, D, D), lambda b, e: (e, 0, 0)),
    ]

    outs = pl.pallas_call(
        kernel,
        out_shape=out_shape,
        grid_spec=pltpu.PrefetchScalarGridSpec(
            num_scalar_prefetch=0,
            grid=(B // bt, n_enc),
            in_specs=in_specs,
            out_specs=out_specs,
        ),
        compiler_params=pltpu.CompilerParams(
            dimension_semantics=("parallel", "arbitrary"),
            vmem_limit_bytes=vmem_limit),
    )(x, wqkv, wo)

    x_stack = outs[0]
    attns = list(outs[1:])
    return x_stack, attns


def _reference_forward(x, params, inp_lens):
    """Pure-JAX reference for correctness checking."""
    L = x.shape[1]
    outs, attns = [], []
    for i_len, (wq, wk, wv, wo) in zip(inp_lens, params):
        inp_len = L // (2 ** i_len)
        xs = x[:, -inp_len:, :].astype(jnp.float32)
        q = xs @ wq
        k = xs @ wk
        v = xs @ wv
        s = jnp.einsum("bld,bmd->blm", q, k) / math.sqrt(x.shape[-1])
        a = jax.nn.softmax(s, axis=-1)
        o = jnp.einsum("blm,bmd->bld", a, v) @ wo
        outs.append(xs + o)
        attns.append(a)
    return jnp.concatenate(outs, axis=-2), attns


if __name__ == "__main__":
    B, L, D = 2, 8, 32
    inp_lens = (0, 1, 2)              # suffix lengths: 8, 4, 2
    n_encoders = len(inp_lens)

    key = jax.random.PRNGKey(0)
    key, xk = jax.random.split(key)
    x = jax.random.normal(xk, (B, L, D), dtype=jnp.float32)

    # Deterministic per-encoder parameter init (Wq, Wk, Wv, Wo), all (D, D).
    params = []
    for _ in range(n_encoders):
        ws = []
        for _ in range(4):
            key, wkey = jax.random.split(key)
            ws.append(jax.random.normal(wkey, (D, D), dtype=jnp.float32)
                      * (1.0 / math.sqrt(D)))
        params.append(tuple(ws))

    fwd = jax.jit(functools.partial(encoder_stack_forward, inp_lens=inp_lens))
    x_stack, attns = fwd(x, params)
    x_stack = jax.block_until_ready(x_stack)
    attns = [jax.block_until_ready(a) for a in attns]

    # sanity check against pure-JAX reference
    ref_x, ref_attns = _reference_forward(x, params, inp_lens)
    assert x_stack.shape == (B, sum(L // 2 ** i for i in inp_lens), D)
    assert jnp.allclose(x_stack, ref_x, atol=1e-4, rtol=1e-4)
    for a, ra in zip(attns, ref_attns):
        # attention maps are returned in bfloat16 (halves their HBM writeback)
        assert a.dtype == jnp.bfloat16
        assert jnp.allclose(a.astype(jnp.float32), ra, atol=1e-2, rtol=1e-2)

    print("KERNEL_OK")
</pallas_src>

<mosaic_0001>
module attributes {stable_mosaic.version = 11 : i64} {
  func.func @_encoder_stack_kernel(%arg0: i32, %arg1: i32, %arg2: memref<1x8x32xf32, #tpu.memory_space<vmem>>, %arg3: memref<1x3x32x32xf32, #tpu.memory_space<vmem>>, %arg4: memref<1x32x32xf32, #tpu.memory_space<vmem>>, %arg5: memref<1x14x32xf32, #tpu.memory_space<vmem>>, %arg6: memref<1x8x8xbf16, #tpu.memory_space<vmem>>, %arg7: memref<1x4x4xbf16, #tpu.memory_space<vmem>>, %arg8: memref<1x2x2xbf16, #tpu.memory_space<vmem>>) attributes {dimension_semantics = [#tpu.dimension_semantics<parallel>, #tpu.dimension_semantics<arbitrary>], iteration_bounds = array<i64: 2, 3>, scalar_prefetch = 0 : i64, scratch_operands = 0 : i64, tpu.core_type = #tpu.core_type<tc>, window_params = [{transform_indices = @transform_0, window_bounds = array<i64: 1, 8, 32>}, {transform_indices = @transform_1, window_bounds = array<i64: 1, 3, 32, 32>}, {transform_indices = @transform_2, window_bounds = array<i64: 1, 32, 32>}, {transform_indices = @transform_3, window_bounds = array<i64: 1, 14, 32>}, {transform_indices = @transform_4, window_bounds = array<i64: 1, 8, 8>}, {transform_indices = @transform_5, window_bounds = array<i64: 1, 4, 4>}, {transform_indices = @transform_6, window_bounds = array<i64: 1, 2, 2>}]} {
    %c0 = arith.constant 0 : index
    %c0_0 = arith.constant 0 : index
    %c0_1 = arith.constant 0 : index
    %0 = vector.load %arg2[%c0, %c0_0, %c0_1] : memref<1x8x32xf32, #tpu.memory_space<vmem>>, vector<1x8x32xf32>
    %c0_i32 = arith.constant 0 : i32
    %1 = arith.cmpi eq, %arg1, %c0_i32 : i32
    %2 = arith.extui %1 : i1 to i32
    %c0_i32_2 = arith.constant 0 : i32
    %3 = arith.cmpi ne, %2, %c0_i32_2 : i32
    scf.if %3 {
      %10 = vector.shape_cast %0 : vector<1x8x32xf32> to vector<8x32xf32>
      %c0_5 = arith.constant 0 : index
      %c0_6 = arith.constant 0 : index
      %c0_7 = arith.constant 0 : index
      %c0_8 = arith.constant 0 : index
      %11 = vector.load %arg3[%c0_5, %c0_6, %c0_7, %c0_8] : memref<1x3x32x32xf32, #tpu.memory_space<vmem>>, vector<1x1x32x32xf32>
      %12 = vector.shape_cast %11 : vector<1x1x32x32xf32> to vector<32x32xf32>
      %cst = arith.constant dense<0.000000e+00> : vector<8x32xf32>
      %13 = tpu.matmul %10, %12, %cst {dimension_numbers = #tpu.dot_dimension_numbers<[1], [0], [0], [1], [0, 0, 1, 1], [], []>} : vector<8x32xf32>, vector<32x32xf32>, vector<8x32xf32> -> vector<8x32xf32>
      %c0_9 = arith.constant 0 : index
      %c1 = arith.constant 1 : index
      %c0_10 = arith.constant 0 : index
      %c0_11 = arith.constant 0 : index
      %14 = vector.load %arg3[%c0_9, %c1, %c0_10, %c0_11] : memref<1x3x32x32xf32, #tpu.memory_space<vmem>>, vector<1x1x32x32xf32>
      %15 = vector.shape_cast %14 : vector<1x1x32x32xf32> to vector<32x32xf32>
      %cst_12 = arith.constant dense<0.000000e+00> : vector<8x32xf32>
      %16 = tpu.matmul %10, %15, %cst_12 {dimension_numbers = #tpu.dot_dimension_numbers<[1], [0], [0], [1], [0, 0, 1, 1], [], []>} : vector<8x32xf32>, vector<32x32xf32>, vector<8x32xf32> -> vector<8x32xf32>
      %c0_13 = arith.constant 0 : index
      %c2 = arith.constant 2 : index
      %c0_14 = arith.constant 0 : index
      %c0_15 = arith.constant 0 : index
      %17 = vector.load %arg3[%c0_13, %c2, %c0_14, %c0_15] : memref<1x3x32x32xf32, #tpu.memory_space<vmem>>, vector<1x1x32x32xf32>
      %18 = vector.shape_cast %17 : vector<1x1x32x32xf32> to vector<32x32xf32>
      %cst_16 = arith.constant dense<0.000000e+00> : vector<8x32xf32>
      %19 = tpu.matmul %10, %18, %cst_16 {dimension_numbers = #tpu.dot_dimension_numbers<[1], [0], [0], [1], [0, 0, 1, 1], [], []>} : vector<8x32xf32>, vector<32x32xf32>, vector<8x32xf32> -> vector<8x32xf32>
      %20 = vector.shape_cast %13 : vector<8x32xf32> to vector<1x8x32xf32>
      %21 = vector.shape_cast %16 : vector<8x32xf32> to vector<1x8x32xf32>
      %22 = vector.shape_cast %19 : vector<8x32xf32> to vector<1x8x32xf32>
      "tpu.trace_start"() <{level = 10 : i32, message = "bqd,bkd->bqk"}> : () -> ()
      %cst_17 = arith.constant dense<0.000000e+00> : vector<1x8x8xf32>
      %23 = tpu.matmul %20, %21, %cst_17 {dimension_numbers = #tpu.dot_dimension_numbers<[2], [2], [1], [1], [0, 0, 0, 1, 1, 1], [0], [0]>} : vector<1x8x32xf32>, vector<1x8x32xf32>, vector<1x8x8xf32> -> vector<1x8x8xf32>
      "tpu.trace_stop"() : () -> ()
      %cst_18 = arith.constant 0.176776692 : f32
      %24 = vector.broadcast %cst_18 : f32 to vector<1x8x8xf32>
      %25 = arith.mulf %23, %24 : vector<1x8x8xf32>
      %cst_19 = arith.constant dense<0xFF800000> : vector<1x8xf32>
      %26 = vector.multi_reduction <maximumf>, %25, %cst_19 [2] : vector<1x8x8xf32> to vector<1x8xf32>
      %27 = vector.shape_cast %26 : vector<1x8xf32> to vector<1x8x1xf32>
      %28 = vector.broadcast %27 : vector<1x8x1xf32> to vector<1x8x8xf32>
      %29 = arith.subf %25, %28 : vector<1x8x8xf32>
      %30 = math.exp %29 : vector<1x8x8xf32>
      %cst_20 = arith.constant dense<0.000000e+00> : vector<1x8xf32>
      %31 = vector.multi_reduction <add>, %30, %cst_20 [2] : vector<1x8x8xf32> to vector<1x8xf32>
      %32 = vector.shape_cast %31 : vector<1x8xf32> to vector<1x8x1xf32>
      %33 = tpu.reciprocal %32 {approx = true} : vector<1x8x1xf32> -> vector<1x8x1xf32>
      %34 = arith.mulf %32, %33 : vector<1x8x1xf32>
      %cst_21 = arith.constant 2.000000e+00 : f32
      %35 = vector.broadcast %cst_21 : f32 to vector<1x8x1xf32>
      %36 = arith.subf %35, %34 : vector<1x8x1xf32>
      %37 = arith.mulf %33, %36 : vector<1x8x1xf32>
      %38 = vector.broadcast %37 : vector<1x8x1xf32> to vector<1x8x8xf32>
      %39 = arith.mulf %30, %38 : vector<1x8x8xf32>
      "tpu.trace_start"() <{level = 10 : i32, message = "bqk,bkd->bqd"}> : () -> ()
      %cst_22 = arith.constant dense<0.000000e+00> : vector<1x8x32xf32>
      %40 = tpu.matmul %39, %22, %cst_22 {dimension_numbers = #tpu.dot_dimension_numbers<[2], [1], [1], [2], [0, 0, 0, 1, 1, 2], [0], [0]>} : vector<1x8x8xf32>, vector<1x8x32xf32>, vector<1x8x32xf32> -> vector<1x8x32xf32>
      "tpu.trace_stop"() : () -> ()
      %41 = vector.shape_cast %40 : vector<1x8x32xf32> to vector<8x32xf32>
      %c0_23 = arith.constant 0 : index
      %c0_24 = arith.constant 0 : index
      %c0_25 = arith.constant 0 : index
      %42 = vector.load %arg4[%c0_23, %c0_24, %c0_25] : memref<1x32x32xf32, #tpu.memory_space<vmem>>, vector<1x32x32xf32>
      %43 = vector.shape_cast %42 : vector<1x32x32xf32> to vector<32x32xf32>
      %cst_26 = arith.constant dense<0.000000e+00> : vector<8x32xf32>
      %44 = tpu.matmul %41, %43, %cst_26 {dimension_numbers = #tpu.dot_dimension_numbers<[1], [0], [0], [1], [0, 0, 1, 1], [], []>} : vector<8x32xf32>, vector<32x32xf32>, vector<8x32xf32> -> vector<8x32xf32>
      %45 = vector.shape_cast %44 : vector<8x32xf32> to vector<1x8x32xf32>
      %46 = arith.addf %0, %45 : vector<1x8x32xf32>
      %c0_27 = arith.constant 0 : index
      %c0_28 = arith.constant 0 : index
      %c0_29 = arith.constant 0 : index
      %47 = vector.load %arg5[%c0_27, %c0_28, %c0_29] : memref<1x14x32xf32, #tpu.memory_space<vmem>>, vector<1x8x32xf32>
      tpu.vector_store %arg5[%c0_27, %c0_28, %c0_29], %46 {strides = array<i32>} : memref<1x14x32xf32, #tpu.memory_space<vmem>>, vector<1x8x32xf32>,
      %48 = arith.truncf %39 : vector<1x8x8xf32> to vector<1x8x8xbf16>
      %c0_30 = arith.constant 0 : index
      %c0_31 = arith.constant 0 : index
      %c0_32 = arith.constant 0 : index
      %49 = vector.load %arg6[%c0_30, %c0_31, %c0_32] : memref<1x8x8xbf16, #tpu.memory_space<vmem>>, vector<1x8x8xbf16>
      tpu.vector_store %arg6[%c0_30, %c0_31, %c0_32], %48 {strides = array<i32>} : memref<1x8x8xbf16, #tpu.memory_space<vmem>>, vector<1x8x8xbf16>,
    } else {
    }
    %c1_i32 = arith.constant 1 : i32
    %4 = arith.cmpi eq, %arg1, %c1_i32 : i32
    %5 = arith.extui %4 : i1 to i32
    %c0_i32_3 = arith.constant 0 : i32
    %6 = arith.cmpi ne, %5, %c0_i32_3 : i32
    scf.if %6 {
      %10 = vector.extract_strided_slice %0 {offsets = [0, 4, 0], sizes = [1, 4, 32], strides = [1, 1, 1]} : vector<1x8x32xf32> to vector<1x4x32xf32>
      %11 = vector.shape_cast %10 : vector<1x4x32xf32> to vector<4x32xf32>
      %c0_5 = arith.constant 0 : index
      %c0_6 = arith.constant 0 : index
      %c0_7 = arith.constant 0 : index
      %c0_8 = arith.constant 0 : index
      %12 = vector.load %arg3[%c0_5, %c0_6, %c0_7, %c0_8] : memref<1x3x32x32xf32, #tpu.memory_space<vmem>>, vector<1x1x32x32xf32>
      %13 = vector.shape_cast %12 : vector<1x1x32x32xf32> to vector<32x32xf32>
      %cst = arith.constant dense<0.000000e+00> : vector<4x32xf32>
      %14 = tpu.matmul %11, %13, %cst {dimension_numbers = #tpu.dot_dimension_numbers<[1], [0], [0], [1], [0, 0, 1, 1], [], []>} : vector<4x32xf32>, vector<32x32xf32>, vector<4x32xf32> -> vector<4x32xf32>
      %c0_9 = arith.constant 0 : index
      %c1 = arith.constant 1 : index
      %c0_10 = arith.constant 0 : index
      %c0_11 = arith.constant 0 : index
      %15 = vector.load %arg3[%c0_9, %c1, %c0_10, %c0_11] : memref<1x3x32x32xf32, #tpu.memory_space<vmem>>, vector<1x1x32x32xf32>
      %16 = vector.shape_cast %15 : vector<1x1x32x32xf32> to vector<32x32xf32>
      %cst_12 = arith.constant dense<0.000000e+00> : vector<4x32xf32>
      %17 = tpu.matmul %11, %16, %cst_12 {dimension_numbers = #tpu.dot_dimension_numbers<[1], [0], [0], [1], [0, 0, 1, 1], [], []>} : vector<4x32xf32>, vector<32x32xf32>, vector<4x32xf32> -> vector<4x32xf32>
      %c0_13 = arith.constant 0 : index
      %c2 = arith.constant 2 : index
      %c0_14 = arith.constant 0 : index
      %c0_15 = arith.constant 0 : index
      %18 = vector.load %arg3[%c0_13, %c2, %c0_14, %c0_15] : memref<1x3x32x32xf32, #tpu.memory_space<vmem>>, vector<1x1x32x32xf32>
      %19 = vector.shape_cast %18 : vector<1x1x32x32xf32> to vector<32x32xf32>
      %cst_16 = arith.constant dense<0.000000e+00> : vector<4x32xf32>
      %20 = tpu.matmul %11, %19, %cst_16 {dimension_numbers = #tpu.dot_dimension_numbers<[1], [0], [0], [1], [0, 0, 1, 1], [], []>} : vector<4x32xf32>, vector<32x32xf32>, vector<4x32xf32> -> vector<4x32xf32>
      %21 = vector.shape_cast %14 : vector<4x32xf32> to vector<1x4x32xf32>
      %22 = vector.shape_cast %17 : vector<4x32xf32> to vector<1x4x32xf32>
      %23 = vector.shape_cast %20 : vector<4x32xf32> to vector<1x4x32xf32>
      "tpu.trace_start"() <{level = 10 : i32, message = "bqd,bkd->bqk"}> : () -> ()
      %cst_17 = arith.constant dense<0.000000e+00> : vector<1x4x4xf32>
      %24 = tpu.matmul %21, %22, %cst_17 {dimension_numbers = #tpu.dot_dimension_numbers<[2], [2], [1], [1], [0, 0, 0, 1, 1, 1], [0], [0]>} : vector<1x4x32xf32>, vector<1x4x32xf32>, vector<1x4x4xf32> -> vector<1x4x4xf32>
      "tpu.trace_stop"() : () -> ()
      %cst_18 = arith.constant 0.176776692 : f32
      %25 = vector.broadcast %cst_18 : f32 to vector<1x4x4xf32>
      %26 = arith.mulf %24, %25 : vector<1x4x4xf32>
      %cst_19 = arith.constant dense<0xFF800000> : vector<1x4xf32>
      %27 = vector.multi_reduction <maximumf>, %26, %cst_19 [2] : vector<1x4x4xf32> to vector<1x4xf32>
      %28 = vector.shape_cast %27 : vector<1x4xf32> to vector<1x4x1xf32>
      %29 = vector.broadcast %28 : vector<1x4x1xf32> to vector<1x4x4xf32>
      %30 = arith.subf %26, %29 : vector<1x4x4xf32>
      %31 = math.exp %30 : vector<1x4x4xf32>
      %cst_20 = arith.constant dense<0.000000e+00> : vector<1x4xf32>
      %32 = vector.multi_reduction <add>, %31, %cst_20 [2] : vector<1x4x4xf32> to vector<1x4xf32>
      %33 = vector.shape_cast %32 : vector<1x4xf32> to vector<1x4x1xf32>
      %34 = tpu.reciprocal %33 {approx = true} : vector<1x4x1xf32> -> vector<1x4x1xf32>
      %35 = arith.mulf %33, %34 : vector<1x4x1xf32>
      %cst_21 = arith.constant 2.000000e+00 : f32
      %36 = vector.broadcast %cst_21 : f32 to vector<1x4x1xf32>
      %37 = arith.subf %36, %35 : vector<1x4x1xf32>
      %38 = arith.mulf %34, %37 : vector<1x4x1xf32>
      %39 = vector.broadcast %38 : vector<1x4x1xf32> to vector<1x4x4xf32>
      %40 = arith.mulf %31, %39 : vector<1x4x4xf32>
      "tpu.trace_start"() <{level = 10 : i32, message = "bqk,bkd->bqd"}> : () -> ()
      %cst_22 = arith.constant dense<0.000000e+00> : vector<1x4x32xf32>
      %41 = tpu.matmul %40, %23, %cst_22 {dimension_numbers = #tpu.dot_dimension_numbers<[2], [1], [1], [2], [0, 0, 0, 1, 1, 2], [0], [0]>} : vector<1x4x4xf32>, vector<1x4x32xf32>, vector<1x4x32xf32> -> vector<1x4x32xf32>
      "tpu.trace_stop"() : () -> ()
      %42 = vector.shape_cast %41 : vector<1x4x32xf32> to vector<4x32xf32>
      %c0_23 = arith.constant 0 : index
      %c0_24 = arith.constant 0 : index
      %c0_25 = arith.constant 0 : index
      %43 = vector.load %arg4[%c0_23, %c0_24, %c0_25] : memref<1x32x32xf32, #tpu.memory_space<vmem>>, vector<1x32x32xf32>
      %44 = vector.shape_cast %43 : vector<1x32x32xf32> to vector<32x32xf32>
      %cst_26 = arith.constant dense<0.000000e+00> : vector<4x32xf32>
      %45 = tpu.matmul %42, %44, %cst_26 {dimension_numbers = #tpu.dot_dimension_numbers<[1], [0], [0], [1], [0, 0, 1, 1], [], []>} : vector<4x32xf32>, vector<32x32xf32>, vector<4x32xf32> -> vector<4x32xf32>
      %46 = vector.shape_cast %45 : vector<4x32xf32> to vector<1x4x32xf32>
      %47 = arith.addf %10, %46 : vector<1x4x32xf32>
      %c0_27 = arith.constant 0 : index
      %c8 = arith.constant 8 : index
      %c0_28 = arith.constant 0 : index
      %48 = vector.load %arg5[%c0_27, %c8, %c0_28] : memref<1x14x32xf32, #tpu.memory_space<vmem>>, vector<1x4x32xf32>
      tpu.vector_store %arg5[%c0_27, %c8, %c0_28], %47 {strides = array<i32>} : memref<1x14x32xf32, #tpu.memory_space<vmem>>, vector<1x4x32xf32>,
      %49 = arith.truncf %40 : vector<1x4x4xf32> to vector<1x4x4xbf16>
      %c0_29 = arith.constant 0 : index
      %c0_30 = arith.constant 0 : index
      %c0_31 = arith.constant 0 : index
      %50 = vector.load %arg7[%c0_29, %c0_30, %c0_31] : memref<1x4x4xbf16, #tpu.memory_space<vmem>>, vector<1x4x4xbf16>
      tpu.vector_store %arg7[%c0_29, %c0_30, %c0_31], %49 {strides = array<i32>} : memref<1x4x4xbf16, #tpu.memory_space<vmem>>, vector<1x4x4xbf16>,
    } else {
    }
    %c2_i32 = arith.constant 2 : i32
    %7 = arith.cmpi eq, %arg1, %c2_i32 : i32
    %8 = arith.extui %7 : i1 to i32
    %c0_i32_4 = arith.constant 0 : i32
    %9 = arith.cmpi ne, %8, %c0_i32_4 : i32
    scf.if %9 {
      %10 = vector.extract_strided_slice %0 {offsets = [0, 6, 0], sizes = [1, 2, 32], strides = [1, 1, 1]} : vector<1x8x32xf32> to vector<1x2x32xf32>
      %11 = vector.shape_cast %10 : vector<1x2x32xf32> to vector<2x32xf32>
      %c0_5 = arith.constant 0 : index
      %c0_6 = arith.constant 0 : index
      %c0_7 = arith.constant 0 : index
      %c0_8 = arith.constant 0 : index
      %12 = vector.load %arg3[%c0_5, %c0_6, %c0_7, %c0_8] : memref<1x3x32x32xf32, #tpu.memory_space<vmem>>, vector<1x1x32x32xf32>
      %13 = vector.shape_cast %12 : vector<1x1x32x32xf32> to vector<32x32xf32>
      %cst = arith.constant dense<0.000000e+00> : vector<2x32xf32>
      %14 = tpu.matmul %11, %13, %cst {dimension_numbers = #tpu.dot_dimension_numbers<[1], [0], [0], [1], [0, 0, 1, 1], [], []>} : vector<2x32xf32>, vector<32x32xf32>, vector<2x32xf32> -> vector<2x32xf32>
      %c0_9 = arith.constant 0 : index
      %c1 = arith.constant 1 : index
      %c0_10 = arith.constant 0 : index
      %c0_11 = arith.constant 0 : index
      %15 = vector.load %arg3[%c0_9, %c1, %c0_10, %c0_11] : memref<1x3x32x32xf32, #tpu.memory_space<vmem>>, vector<1x1x32x32xf32>
      %16 = vector.shape_cast %15 : vector<1x1x32x32xf32> to vector<32x32xf32>
      %cst_12 = arith.constant dense<0.000000e+00> : vector<2x32xf32>
      %17 = tpu.matmul %11, %16, %cst_12 {dimension_numbers = #tpu.dot_dimension_numbers<[1], [0], [0], [1], [0, 0, 1, 1], [], []>} : vector<2x32xf32>, vector<32x32xf32>, vector<2x32xf32> -> vector<2x32xf32>
      %c0_13 = arith.constant 0 : index
      %c2 = arith.constant 2 : index
      %c0_14 = arith.constant 0 : index
      %c0_15 = arith.constant 0 : index
      %18 = vector.load %arg3[%c0_13, %c2, %c0_14, %c0_15] : memref<1x3x32x32xf32, #tpu.memory_space<vmem>>, vector<1x1x32x32xf32>
      %19 = vector.shape_cast %18 : vector<1x1x32x32xf32> to vector<32x32xf32>
      %cst_16 = arith.constant dense<0.000000e+00> : vector<2x32xf32>
      %20 = tpu.matmul %11, %19, %cst_16 {dimension_numbers = #tpu.dot_dimension_numbers<[1], [0], [0], [1], [0, 0, 1, 1], [], []>} : vector<2x32xf32>, vector<32x32xf32>, vector<2x32xf32> -> vector<2x32xf32>
      %21 = vector.shape_cast %14 : vector<2x32xf32> to vector<1x2x32xf32>
      %22 = vector.shape_cast %17 : vector<2x32xf32> to vector<1x2x32xf32>
      %23 = vector.shape_cast %20 : vector<2x32xf32> to vector<1x2x32xf32>
      "tpu.trace_start"() <{level = 10 : i32, message = "bqd,bkd->bqk"}> : () -> ()
      %cst_17 = arith.constant dense<0.000000e+00> : vector<1x2x2xf32>
      %24 = tpu.matmul %21, %22, %cst_17 {dimension_numbers = #tpu.dot_dimension_numbers<[2], [2], [1], [1], [0, 0, 0, 1, 1, 1], [0], [0]>} : vector<1x2x32xf32>, vector<1x2x32xf32>, vector<1x2x2xf32> -> vector<1x2x2xf32>
      "tpu.trace_stop"() : () -> ()
      %cst_18 = arith.constant 0.176776692 : f32
      %25 = vector.broadcast %cst_18 : f32 to vector<1x2x2xf32>
      %26 = arith.mulf %24, %25 : vector<1x2x2xf32>
      %cst_19 = arith.constant dense<0xFF800000> : vector<1x2xf32>
      %27 = vector.multi_reduction <maximumf>, %26, %cst_19 [2] : vector<1x2x2xf32> to vector<1x2xf32>
      %28 = vector.shape_cast %27 : vector<1x2xf32> to vector<1x2x1xf32>
      %29 = vector.broadcast %28 : vector<1x2x1xf32> to vector<1x2x2xf32>
      %30 = arith.subf %26, %29 : vector<1x2x2xf32>
      %31 = math.exp %30 : vector<1x2x2xf32>
      %cst_20 = arith.constant dense<0.000000e+00> : vector<1x2xf32>
      %32 = vector.multi_reduction <add>, %31, %cst_20 [2] : vector<1x2x2xf32> to vector<1x2xf32>
      %33 = vector.shape_cast %32 : vector<1x2xf32> to vector<1x2x1xf32>
      %34 = tpu.reciprocal %33 {approx = true} : vector<1x2x1xf32> -> vector<1x2x1xf32>
      %35 = arith.mulf %33, %34 : vector<1x2x1xf32>
      %cst_21 = arith.constant 2.000000e+00 : f32
      %36 = vector.broadcast %cst_21 : f32 to vector<1x2x1xf32>
      %37 = arith.subf %36, %35 : vector<1x2x1xf32>
      %38 = arith.mulf %34, %37 : vector<1x2x1xf32>
      %39 = vector.broadcast %38 : vector<1x2x1xf32> to vector<1x2x2xf32>
      %40 = arith.mulf %31, %39 : vector<1x2x2xf32>
      "tpu.trace_start"() <{level = 10 : i32, message = "bqk,bkd->bqd"}> : () -> ()
      %cst_22 = arith.constant dense<0.000000e+00> : vector<1x2x32xf32>
      %41 = tpu.matmul %40, %23, %cst_22 {dimension_numbers = #tpu.dot_dimension_numbers<[2], [1], [1], [2], [0, 0, 0, 1, 1, 2], [0], [0]>} : vector<1x2x2xf32>, vector<1x2x32xf32>, vector<1x2x32xf32> -> vector<1x2x32xf32>
      "tpu.trace_stop"() : () -> ()
      %42 = vector.shape_cast %41 : vector<1x2x32xf32> to vector<2x32xf32>
      %c0_23 = arith.constant 0 : index
      %c0_24 = arith.constant 0 : index
      %c0_25 = arith.constant 0 : index
      %43 = vector.load %arg4[%c0_23, %c0_24, %c0_25] : memref<1x32x32xf32, #tpu.memory_space<vmem>>, vector<1x32x32xf32>
      %44 = vector.shape_cast %43 : vector<1x32x32xf32> to vector<32x32xf32>
      %cst_26 = arith.constant dense<0.000000e+00> : vector<2x32xf32>
      %45 = tpu.matmul %42, %44, %cst_26 {dimension_numbers = #tpu.dot_dimension_numbers<[1], [0], [0], [1], [0, 0, 1, 1], [], []>} : vector<2x32xf32>, vector<32x32xf32>, vector<2x32xf32> -> vector<2x32xf32>
      %46 = vector.shape_cast %45 : vector<2x32xf32> to vector<1x2x32xf32>
      %47 = arith.addf %10, %46 : vector<1x2x32xf32>
      %c0_27 = arith.constant 0 : index
      %c12 = arith.constant 12 : index
      %c0_28 = arith.constant 0 : index
      %48 = vector.load %arg5[%c0_27, %c12, %c0_28] : memref<1x14x32xf32, #tpu.memory_space<vmem>>, vector<1x2x32xf32>
      tpu.vector_store %arg5[%c0_27, %c12, %c0_28], %47 {strides = array<i32>} : memref<1x14x32xf32, #tpu.memory_space<vmem>>, vector<1x2x32xf32>,
      %49 = arith.truncf %40 : vector<1x2x2xf32> to vector<1x2x2xbf16>
      %c0_29 = arith.constant 0 : index
      %c0_30 = arith.constant 0 : index
      %c0_31 = arith.constant 0 : index
      %50 = vector.load %arg8[%c0_29, %c0_30, %c0_31] : memref<1x2x2xbf16, #tpu.memory_space<vmem>>, vector<1x2x2xbf16>
      tpu.vector_store %arg8[%c0_29, %c0_30, %c0_31], %49 {strides = array<i32>} : memref<1x2x2xbf16, #tpu.memory_space<vmem>>, vector<1x2x2xbf16>,
    } else {
    }
    return
  }
  func.func @transform_0(%arg0: i32, %arg1: i32) -> (i32, i32, i32) {
    %c0_i32 = arith.constant 0 : i32
    %c0_i32_0 = arith.constant 0 : i32
    %c0_i32_1 = arith.constant 0 : i32
    return %arg0, %c0_i32, %c0_i32_0 : i32, i32, i32
  }
  func.func @transform_1(%arg0: i32, %arg1: i32) -> (i32, i32, i32, i32) {
    %c0_i32 = arith.constant 0 : i32
    %c0_i32_0 = arith.constant 0 : i32
    %c0_i32_1 = arith.constant 0 : i32
    %c0_i32_2 = arith.constant 0 : i32
    return %arg1, %c0_i32, %c0_i32_0, %c0_i32_1 : i32, i32, i32, i32
  }
  func.func @transform_2(%arg0: i32, %arg1: i32) -> (i32, i32, i32) {
    %c0_i32 = arith.constant 0 : i32
    %c0_i32_0 = arith.constant 0 : i32
    %c0_i32_1 = arith.constant 0 : i32
    return %arg1, %c0_i32, %c0_i32_0 : i32, i32, i32
  }
  func.func @transform_3(%arg0: i32, %arg1: i32) -> (i32, i32, i32) {
    %c0_i32 = arith.constant 0 : i32
    %c0_i32_0 = arith.constant 0 : i32
    %c0_i32_1 = arith.constant 0 : i32
    return %arg0, %c0_i32, %c0_i32_0 : i32, i32, i32
  }
  func.func @transform_4(%arg0: i32, %arg1: i32) -> (i32, i32, i32) {
    %c0_i32 = arith.constant 0 : i32
    %c0_i32_0 = arith.constant 0 : i32
    %c0_i32_1 = arith.constant 0 : i32
    return %arg0, %c0_i32, %c0_i32_0 : i32, i32, i32
  }
  func.func @transform_5(%arg0: i32, %arg1: i32) -> (i32, i32, i32) {
    %c0_i32 = arith.constant 0 : i32
    %c0_i32_0 = arith.constant 0 : i32
    %c0_i32_1 = arith.constant 0 : i32
    return %arg0, %c0_i32, %c0_i32_0 : i32, i32, i32
  }
  func.func @transform_6(%arg0: i32, %arg1: i32) -> (i32, i32, i32) {
    %c0_i32 = arith.constant 0 : i32
    %c0_i32_0 = arith.constant 0 : i32
    %c0_i32_1 = arith.constant 0 : i32
    return %arg0, %c0_i32, %c0_i32_0 : i32, i32, i32
  }
}

</mosaic_0001>

<llo_original>
// kernel: encoder_stack_forward.1
$region0: #{encoder_stack_forward.1}
  #allocation0 [shape = 'u32[]', space=smem, size = 0x4, offset = 0x4, fixed_abs, tag = 'smem constant byte address 0x4 - core index']
  #allocation1 [shape = 'u32[72,128]{1,0:T(1,128)}', space=vmem, size = 0x9000, scoped, tag = 'internal scratch']
  %s0 = inlined_call_operand.vmem [shape: f32[2,8,32], index: 0, kind: input, shape index: {}]
  %s1 = inlined_call_operand.vmem [shape: f32[3,3,32,32], index: 1, kind: input, shape index: {}]
  %s2 = inlined_call_operand.vmem [shape: f32[3,32,32], index: 2, kind: input, shape index: {}]
  %s3 = inlined_call_operand.vmem [shape: f32[2,14,32], index: 3, kind: output, shape index: {0}]
  %s4 = inlined_call_operand.hbm [shape: bf16[2,8,8], index: 4, kind: output, shape index: {1}]
  %s5 = inlined_call_operand.hbm [shape: bf16[2,4,4], index: 5, kind: output, shape index: {2}]
  %s6 = inlined_call_operand.hbm [shape: bf16[2,2,2], index: 6, kind: output, shape index: {3}]
  %7 = xla_tuple %s3, %s4, %s5, %s6
  %s8 = sld [smem:[#allocation0]]
  $region81: #{encoder_stack_forward.1} parent=0
    _
  %s10 = ssub.s32 1, %s8
  %s11 = scalar_select 0, %s10, %s8
  $region1: #{encoder_stack_forward.1} parent=0
    #allocation2 [shape = 'u8[4096]{0}', space=vmem, size = 0x1000, scoped, tag = 'output window, operand 1']
    #allocation3 [shape = 's32[2]{0}', space=sflag, size = 0x8, scoped, tag = 'scoped memory for encoder_stack_forward.1']
    #allocation4 [shape = 'u8[2048]{0}', space=vmem, size = 0x800, scoped, tag = 'output window, operand 2']
    #allocation5 [shape = 's32[2]{0}', space=sflag, size = 0x8, scoped, tag = 'scoped memory for encoder_stack_forward.1']
    #allocation6 [shape = 'u8[1024]{0}', space=vmem, size = 0x400, scoped, tag = 'output window, operand 3']
    %12 = vsyncpa [#allocation3], 0
    %s13 = scalar_lea.sflag [#allocation3], 1
    %14 = vsyncpa %s13, 0
    %15 = vsyncpa [#allocation5], 0
    %s16 = scalar_lea.sflag [#allocation5], 1
    %17 = vsyncpa %s16, 0
    loop: start=0, step=1, limit=8
    $region2: #{encoder_stack_forward.1} parent=1 // loop_pre_header
      _
    $region3: #{encoder_stack_forward.1} parent=1 // loop_header
      %s19 = sphi 0, %s23
      %p20 = scmp.ge.s32.totalorder %s19, 8
      %s26 = sphi 0, %s38
      %s27 = sphi 0, %s34
      %s28 = sphi 0, %s26
      %s29 = sphi 0, %s27
      %s30 = sphi 0, %s28
      %s31 = sphi 0, %s29
      %s41 = sphi 0, %s43
      %s44 = sphi 0, %s41
      %s45 = sphi 0, %s44
      %s61 = sphi 0, %s45
      %s67 = sphi 0, %s69
      %s70 = sphi 0, %s67
      %s71 = sphi 0, %s70
      %s87 = sphi 0, %s71
      %s93 = sphi 0, %s95
      %s96 = sphi 0, %s93
      %s97 = sphi 0, %s96
      %s113 = sphi 0, %s97
      %s119 = sphi 0, %s121
      %s122 = sphi 0, %s119
      %s123 = sphi 0, %s122
      %s139 = sphi 0, %s123
      %s145 = sphi 0, %s147
      %s148 = sphi 0, %s145
      %s149 = sphi 0, %s148
      %s165 = sphi 0, %s149
      %s171 = sphi 0, %s173
      %s174 = sphi 0, %s171
      %s175 = sphi 0, %s174
      %s191 = sphi 0, %s175
      %s197 = sphi 0, %s199
      %s200 = sphi 0, %s197
      %s201 = sphi 0, %s200
      %s217 = sphi 0, %s201
    $region4: #{encoder_stack_forward.1} parent=1 // loop_header_branch
      %22 = sbr.rel (%p20) target = $region8
    $region5: #{encoder_stack_forward.1} parent=1 // loop_body
      %s24 = ssub.s32 %s19, 1
      %s25 = ssub.s32 %s19, 2
      %s32 = sadd.s32 1, %s27
      %p33 = scmp.ge.s32.totalorder %s32, 3
      %s34 = scalar_select %p33, 0, %s32
      %s35 = sadd.s32 1, %s26
      %s36 = scalar_select %p33, %s35, %s26
      %p37 = scmp.ge.s32.totalorder %s36, 2
      %s38 = scalar_select %p37, 0, %s36
      %s39 = ssub.s32 %s26, %s38
      %p40 = scmp.eq.s32.totalorder %s39, 0
      %s42 = sadd.s32 %s41, 1
      %s43 = scalar_select %p40, %s41, %s42
      %p46 = pneg %p40
      %p47 = scmp.eq.s32.totalorder %s19, 5
      %p48 = por %p46, %p47
      %p49 = scmp.ne.s32.totalorder %s41, %s44
      %p50 = scmp.eq.s32.totalorder %s19, 0
      %p51 = por %p49, %p50
      %p52 = scmp.ne.s32.totalorder %s41, %s44
      %p53 = scmp.eq.s32.totalorder %s24, 5
      %p54 = por %p52, %p53
      %p55 = scmp.ne.s32.totalorder %s44, %s45
      %p56 = scmp.eq.s32.totalorder %s24, 0
      %p57 = por %p55, %p56
      %p58 = scmp.ne.s32.totalorder %s44, %s45
      %p59 = scmp.eq.s32.totalorder %s25, 5
      %p60 = por %p58, %p59
      %p62 = scmp.ne.s32.totalorder %s45, %s61
      %p63 = scmp.eq.s32.totalorder %s25, 0
      %p64 = por %p62, %p63
      %s65 = ssub.s32 %s27, %s34
      %p66 = scmp.eq.s32.totalorder %s65, 0
      %s68 = sadd.s32 %s67, 1
      %s69 = scalar_select %p66, %s67, %s68
      %p72 = pneg %p66
      %p73 = scmp.eq.s32.totalorder %s19, 5
      %p74 = por %p72, %p73
      %p75 = scmp.ne.s32.totalorder %s67, %s70
      %p76 = scmp.eq.s32.totalorder %s19, 0
      %p77 = por %p75, %p76
      %p78 = scmp.ne.s32.totalorder %s67, %s70
      %p79 = scmp.eq.s32.totalorder %s24, 5
      %p80 = por %p78, %p79
      %p81 = scmp.ne.s32.totalorder %s70, %s71
      %p82 = scmp.eq.s32.totalorder %s24, 0
      %p83 = por %p81, %p82
      %p84 = scmp.ne.s32.totalorder %s70, %s71
      %p85 = scmp.eq.s32.totalorder %s25, 5
      %p86 = por %p84, %p85
      %p88 = scmp.ne.s32.totalorder %s71, %s87
      %p89 = scmp.eq.s32.totalorder %s25, 0
      %p90 = por %p88, %p89
      %s91 = ssub.s32 %s27, %s34
      %p92 = scmp.eq.s32.totalorder %s91, 0
      %s94 = sadd.s32 %s93, 1
      %s95 = scalar_select %p92, %s93, %s94
      %p98 = pneg %p92
      %p99 = scmp.eq.s32.totalorder %s19, 5
      %p100 = por %p98, %p99
      %p101 = scmp.ne.s32.totalorder %s93, %s96
      %p102 = scmp.eq.s32.totalorder %s19, 0
      %p103 = por %p101, %p102
      %p104 = scmp.ne.s32.totalorder %s93, %s96
      %p105 = scmp.eq.s32.totalorder %s24, 5
      %p106 = por %p104, %p105
      %p107 = scmp.ne.s32.totalorder %s96, %s97
      %p108 = scmp.eq.s32.totalorder %s24, 0
      %p109 = por %p107, %p108
      %p110 = scmp.ne.s32.totalorder %s96, %s97
      %p111 = scmp.eq.s32.totalorder %s25, 5
      %p112 = por %p110, %p111
      %p114 = scmp.ne.s32.totalorder %s97, %s113
      %p115 = scmp.eq.s32.totalorder %s25, 0
      %p116 = por %p114, %p115
      %s117 = ssub.s32 %s26, %s38
      %p118 = scmp.eq.s32.totalorder %s117, 0
      %s120 = sadd.s32 %s119, 1
      %s121 = scalar_select %p118, %s119, %s120
      %p124 = pneg %p118
      %p125 = scmp.eq.s32.totalorder %s19, 5
      %p126 = por %p124, %p125
      %p127 = scmp.ne.s32.totalorder %s119, %s122
      %p128 = scmp.eq.s32.totalorder %s19, 0
      %p129 = por %p127, %p128
      %p130 = scmp.ne.s32.totalorder %s119, %s122
      %p131 = scmp.eq.s32.totalorder %s24, 5
      %p132 = por %p130, %p131
      %p133 = scmp.ne.s32.totalorder %s122, %s123
      %p134 = scmp.eq.s32.totalorder %s24, 0
      %p135 = por %p133, %p134
      %p136 = scmp.ne.s32.totalorder %s122, %s123
      %p137 = scmp.eq.s32.totalorder %s25, 5
      %p138 = por %p136, %p137
      %p140 = scmp.ne.s32.totalorder %s123, %s139
      %p141 = scmp.eq.s32.totalorder %s25, 0
      %p142 = por %p140, %p141
      %s143 = ssub.s32 %s26, %s38
      %p144 = scmp.eq.s32.totalorder %s143, 0
      %s146 = sadd.s32 %s145, 1
      %s147 = scalar_select %p144, %s145, %s146
      %p150 = pneg %p144
      %p151 = scmp.eq.s32.totalorder %s19, 5
      %p152 = por %p150, %p151
      %p153 = scmp.ne.s32.totalorder %s145, %s148
      %p154 = scmp.eq.s32.totalorder %s19, 0
      %p155 = por %p153, %p154
      %p156 = scmp.ne.s32.totalorder %s145, %s148
      %p157 = scmp.eq.s32.totalorder %s24, 5
      %p158 = por %p156, %p157
      %p159 = scmp.ne.s32.totalorder %s148, %s149
      %p160 = scmp.eq.s32.totalorder %s24, 0
      %p161 = por %p159, %p160
      %p162 = scmp.ne.s32.totalorder %s148, %s149
      %p163 = scmp.eq.s32.totalorder %s25, 5
      %p164 = por %p162, %p163
      %p166 = scmp.ne.s32.totalorder %s149, %s165
      %p167 = scmp.eq.s32.totalorder %s25, 0
      %p168 = por %p166, %p167
      %s169 = ssub.s32 %s26, %s38
      %p170 = scmp.eq.s32.totalorder %s169, 0
      %s172 = sadd.s32 %s171, 1
      %s173 = scalar_select %p170, %s171, %s172
      %p176 = pneg %p170
      %p177 = scmp.eq.s32.totalorder %s19, 5
      %p178 = por %p176, %p177
      %p179 = scmp.ne.s32.totalorder %s171, %s174
      %p180 = scmp.eq.s32.totalorder %s19, 0
      %p181 = por %p179, %p180
      %p182 = scmp.ne.s32.totalorder %s171, %s174
      %p183 = scmp.eq.s32.totalorder %s24, 5
      %p184 = por %p182, %p183
      %p185 = scmp.ne.s32.totalorder %s174, %s175
      %p186 = scmp.eq.s32.totalorder %s24, 0
      %p187 = por %p185, %p186
      %p188 = scmp.ne.s32.totalorder %s174, %s175
      %p189 = scmp.eq.s32.totalorder %s25, 5
      %p190 = por %p188, %p189
      %p192 = scmp.ne.s32.totalorder %s175, %s191
      %p193 = scmp.eq.s32.totalorder %s25, 0
      %p194 = por %p192, %p193
      %s195 = ssub.s32 %s26, %s38
      %p196 = scmp.eq.s32.totalorder %s195, 0
      %s198 = sadd.s32 %s197, 1
      %s199 = scalar_select %p196, %s197, %s198
      %p202 = pneg %p196
      %p203 = scmp.eq.s32.totalorder %s19, 5
      %p204 = por %p202, %p203
      %p205 = scmp.ne.s32.totalorder %s197, %s200
      %p206 = scmp.eq.s32.totalorder %s19, 0
      %p207 = por %p205, %p206
      %p208 = scmp.ne.s32.totalorder %s197, %s200
      %p209 = scmp.eq.s32.totalorder %s24, 5
      %p210 = por %p208, %p209
      %p211 = scmp.ne.s32.totalorder %s200, %s201
      %p212 = scmp.eq.s32.totalorder %s24, 0
      %p213 = por %p211, %p212
      %p214 = scmp.ne.s32.totalorder %s200, %s201
      %p215 = scmp.eq.s32.totalorder %s25, 5
      %p216 = por %p214, %p215
      %p218 = scmp.ne.s32.totalorder %s201, %s217
      %p219 = scmp.eq.s32.totalorder %s25, 0
      %p220 = por %p218, %p219
      %p221 = scmp.le.s32.totalorder 1, %s19
      %p222 = scmp.lt.s32.totalorder %s19, 7
      %p223 = pnand %p221, %p222
      %p224 = pneg %p223
      // Predicated region
      $region9: #{encoder_stack_forward.1} parent=5 // pred_check
        _
      $region10: #{encoder_stack_forward.1} parent=5 // pred_check_branch
        %226 = sbr.rel (%p223) target = $region12
      $region11: #{encoder_stack_forward.1} parent=5 // pred_region
        %s227 = ssub.s32 %s19, 1
      $region12: #{encoder_stack_forward.1} parent=5 // pred_fallthru
        _
      %p228 = scmp.lt.s32.totalorder %s19, 6
      // Predicated region
      $region13: #{encoder_stack_forward.1} parent=5 // pred_check
        %p229 = pneg %p228
      $region14: #{encoder_stack_forward.1} parent=5 // pred_check_branch
        %231 = sbr.rel (%p229) target = $region16
      $region15: #{encoder_stack_forward.1} parent=5 // pred_region
        // Predicated region
        $region17: #{encoder_stack_forward.1} parent=15 // pred_check
          %p232 = pneg %p51
        $region18: #{encoder_stack_forward.1} parent=15 // pred_check_branch
          %234 = sbr.rel (%p232) target = $region20
        $region19: #{encoder_stack_forward.1} parent=15 // pred_region
          %p235 = scmp.lt.s32.totalorder %s26, 1
          %s236 = scalar_select %p235, %s26, 1
          %s237 = smul.addr %s236, 8
          %s238 = scalar_lea.vmem %s0, %s237
        $region20: #{encoder_stack_forward.1} parent=15 // pred_fallthru
          _
        // Predicated region
        $region21: #{encoder_stack_forward.1} parent=15 // pred_check
          %p239 = pneg %p77
        $region22: #{encoder_stack_forward.1} parent=15 // pred_check_branch
          %241 = sbr.rel (%p239) target = $region24
        $region23: #{encoder_stack_forward.1} parent=15 // pred_region
          %p242 = scmp.lt.s32.totalorder %s27, 2
          %s243 = scalar_select %p242, %s27, 2
          %s244 = smul.addr %s243, 12
          %s245 = smul.addr %s244, 8
          %s246 = scalar_lea.vmem %s1, %s245
        $region24: #{encoder_stack_forward.1} parent=15 // pred_fallthru
          _
        // Predicated region
        $region25: #{encoder_stack_forward.1} parent=15 // pred_check
          %p247 = pneg %p103
        $region26: #{encoder_stack_forward.1} parent=15 // pred_check_branch
          %249 = sbr.rel (%p247) target = $region28
        $region27: #{encoder_stack_forward.1} parent=15 // pred_region
          %p250 = scmp.lt.s32.totalorder %s27, 2
          %s251 = scalar_select %p250, %s27, 2
          %s252 = smul.addr %s251, 4
          %s253 = smul.addr %s252, 8
          %s254 = scalar_lea.vmem %s2, %s253
        $region28: #{encoder_stack_forward.1} parent=15 // pred_fallthru
          _
      $region16: #{encoder_stack_forward.1} parent=5 // pred_fallthru
        _
      %p255 = scmp.le.s32.totalorder 1, %s19
      %p256 = scmp.lt.s32.totalorder %s19, 7
      %p257 = pnand %p255, %p256
      %p258 = pneg %p257
      // Predicated region
      $region29: #{encoder_stack_forward.1} parent=5 // pred_check
        _
      $region30: #{encoder_stack_forward.1} parent=5 // pred_check_branch
        %260 = sbr.rel (%p257) target = $region32
      $region31: #{encoder_stack_forward.1} parent=5 // pred_region
        %s261 = ssub.s32 %s19, 1
        %p262 = scmp.lt.s32.totalorder %s28, 1
        %s263 = scalar_select %p262, %s28, 1
        %s264 = smul.addr %s263, 8
        %s265 = scalar_lea.vmem %s0, %s264
        %p266 = pneg %p57
        %p267 = pneg %p54
        %p268 = scmp.lt.s32.totalorder %s29, 2
        %s269 = scalar_select %p268, %s29, 2
        %s270 = smul.addr %s269, 12
        %s271 = smul.addr %s270, 8
        %s272 = scalar_lea.vmem %s1, %s271
        %p273 = pneg %p83
        %p274 = pneg %p80
        %p275 = scmp.lt.s32.totalorder %s29, 2
        %s276 = scalar_select %p275, %s29, 2
        %s277 = smul.addr %s276, 4
        %s278 = smul.addr %s277, 8
        %s279 = scalar_lea.vmem %s2, %s278
        %p280 = pneg %p109
        %p281 = pneg %p106
        %p282 = pneg %p135
        %p283 = pneg %p132
        %p284 = scmp.lt.s32.totalorder %s28, 1
        %s285 = scalar_select %p284, %s28, 1
        %s286 = smul.addr %s285, 2
        %s287 = smul.addr %s286, 8
        %s288 = scalar_lea.vmem %s3, %s287
        %p289 = pneg %p161
        %p290 = pneg %p158
        %s291 = sand.u32 %s148, 1
        %s292 = scalar_lea.sflag [#allocation3], %s291
        %s293 = sand.u32 %s148, 1
        %s294 = smul.addr %s293, 4
        %s295 = scalar_lea.vmem [#allocation2], %s294
        %p296 = pneg %p187
        %p297 = pneg %p184
        %s298 = sand.u32 %s24, 1
        %s299 = scalar_lea.sflag [#allocation5], %s298
        %s300 = sand.u32 %s174, 1
        %s301 = smul.addr %s300, 2
        %s302 = scalar_lea.vmem [#allocation4], %s301
        %p303 = pneg %p213
        %p304 = pneg %p210
        %s305 = sand.u32 %s24, 1
        %s306 = scalar_lea.sflag [#allocation5], %s305
        %s307 = sand.u32 %s200, 1
        %s308 = scalar_lea.vmem [#allocation6], %s307
        %p309 = scmp.lt.s32.totalorder %s28, 1
        %s310 = scalar_select %p309, %s28, 1
        %s311 = smul.addr %s310, 8
        %s312 = scalar_lea.vmem %s0, %s311
        %p313 = scmp.lt.s32.totalorder %s29, 2
        %s314 = scalar_select %p313, %s29, 2
        %s315 = smul.addr %s314, 12
        %s316 = smul.addr %s315, 8
        %s317 = scalar_lea.vmem %s1, %s316
        %p318 = scmp.lt.s32.totalorder %s29, 2
        %s319 = scalar_select %p318, %s29, 2
        %s320 = smul.addr %s319, 4
        %s321 = smul.addr %s320, 8
        %s322 = scalar_lea.vmem %s2, %s321
        %p323 = scmp.lt.s32.totalorder %s28, 1
        %s324 = scalar_select %p323, %s28, 1
        %s325 = smul.addr %s324, 2
        %s326 = smul.addr %s325, 8
        %s327 = scalar_lea.vmem %s3, %s326
        %v328 = vld [vmem:[%s312] sm:$0xff]
        %p329 = scmp.eq.s32.totalorder %s29, 0
        // Predicated region
        $region33: #{encoder_stack_forward.1} parent=31 // pred_check
          %p330 = pneg %p329
        $region34: #{encoder_stack_forward.1} parent=31 // pred_check_branch
          %332 = sbr.rel (%p330) target = $region36
        $region35: #{encoder_stack_forward.1} parent=31 // pred_region
          %v333 = vld [vmem:[%s317] sm:$0xff]
          %v334 = vld [vmem:[%s317 + $0x8] sm:$0xff]
          %v335 = vld [vmem:[%s317 + $0x10] sm:$0xff]
          %v336 = vld [vmem:[%s317 + $0x18] sm:$0xff]
          %vm337 = vcmask 261120
          %v339 = vsel %vm337, %v328, 0
          %341 = vmatpush.msra.mxu0 0.0
          %342 = vmatpush.msra.mxu0 0.0
          %343 = vmatpush.msra.mxu0 0.0
          %344 = vmatpush.msra.mxu0 0.0
          %345 = vmatpush.msra.mxu0 0.0
          %346 = vmatpush.msra.mxu0 0.0
          %347 = vmatpush.msra.mxu0 0.0
          %348 = vmatpush.msra.mxu0 0.0
          %349 = vmatpush.msra.mxu0 0.0
          %350 = vmatpush.msra.mxu0 0.0
          %351 = vmatpush.msra.mxu0 0.0
          %352 = vmatpush.msra.mxu0 0.0
          %353 = vmatpush.msra.mxu0 %v336
          %354 = vmatpush.msra.mxu0 %v335
          %355 = vmatpush.msra.mxu0 %v334
          %356 = vmatpush.msra.mxu0 %v333
          %357 = vmatmul.f32.gmra.mxu0 %v339
          %v358 = vpop.f32.mrf.mxu0
          %v359 = vadd.f32 0.0, %v358
          %360 = vdwg.mxu0
          %s361 = scalar_lea.vmem %s317, 32
          %v362 = vld [vmem:[%s361] sm:$0xff]
          %v363 = vld [vmem:[%s361 + $0x8] sm:$0xff]
          %v364 = vld [vmem:[%s361 + $0x10] sm:$0xff]
          %v365 = vld [vmem:[%s361 + $0x18] sm:$0xff]
          %366 = vmatpush.msra.mxu0 0.0
          %367 = vmatpush.msra.mxu0 0.0
          %368 = vmatpush.msra.mxu0 0.0
          %369 = vmatpush.msra.mxu0 0.0
          %370 = vmatpush.msra.mxu0 0.0
          %371 = vmatpush.msra.mxu0 0.0
          %372 = vmatpush.msra.mxu0 0.0
          %373 = vmatpush.msra.mxu0 0.0
          %374 = vmatpush.msra.mxu0 0.0
          %375 = vmatpush.msra.mxu0 0.0
          %376 = vmatpush.msra.mxu0 0.0
          %377 = vmatpush.msra.mxu0 0.0
          %378 = vmatpush.msra.mxu0 %v365
          %379 = vmatpush.msra.mxu0 %v364
          %380 = vmatpush.msra.mxu0 %v363
          %381 = vmatpush.msra.mxu0 %v362
          %382 = vmatmul.f32.gmra.mxu0 %v339
          %v383 = vpop.f32.mrf.mxu0
          %v384 = vadd.f32 0.0, %v383
          %385 = vdwg.mxu0
          %s386 = scalar_lea.vmem %s317, 64
          %v387 = vld [vmem:[%s386] sm:$0xff]
          %v388 = vld [vmem:[%s386 + $0x8] sm:$0xff]
          %v389 = vld [vmem:[%s386 + $0x10] sm:$0xff]
          %v390 = vld [vmem:[%s386 + $0x18] sm:$0xff]
          %391 = vmatpush.msra.mxu0 0.0
          %392 = vmatpush.msra.mxu0 0.0
          %393 = vmatpush.msra.mxu0 0.0
          %394 = vmatpush.msra.mxu0 0.0
          %395 = vmatpush.msra.mxu0 0.0
          %396 = vmatpush.msra.mxu0 0.0
          %397 = vmatpush.msra.mxu0 0.0
          %398 = vmatpush.msra.mxu0 0.0
          %399 = vmatpush.msra.mxu0 0.0
          %400 = vmatpush.msra.mxu0 0.0
          %401 = vmatpush.msra.mxu0 0.0
          %402 = vmatpush.msra.mxu0 0.0
          %403 = vmatpush.msra.mxu0 %v390
          %404 = vmatpush.msra.mxu0 %v389
          %405 = vmatpush.msra.mxu0 %v388
          %406 = vmatpush.msra.mxu0 %v387
          %407 = vmatmul.f32.gmra.mxu0 %v339
          %v408 = vpop.f32.mrf.mxu0
          %v409 = vadd.f32 0.0, %v408
          %410 = vdwg.mxu0
          %v412 = vsel %vm337, %v359, 0
          %v415 = vsel %vm337, %v384, 0
          %417 = vmatpush.xpose.msra.mxu0 0.0
          %418 = vmatpush.xpose.msra.mxu0 0.0
          %419 = vmatpush.xpose.msra.mxu0 0.0
          %420 = vmatpush.xpose.msra.mxu0 0.0
          %421 = vmatpush.xpose.msra.mxu0 0.0
          %422 = vmatpush.xpose.msra.mxu0 0.0
          %423 = vmatpush.xpose.msra.mxu0 0.0
          %424 = vmatpush.xpose.msra.mxu0 0.0
          %425 = vmatpush.xpose.msra.mxu0 0.0
          %426 = vmatpush.xpose.msra.mxu0 0.0
          %427 = vmatpush.xpose.msra.mxu0 0.0
          %428 = vmatpush.xpose.msra.mxu0 0.0
          %429 = vmatpush.xpose.msra.mxu0 0.0
          %430 = vmatpush.xpose.msra.mxu0 0.0
          %431 = vmatpush.xpose.msra.mxu0 0.0
          %432 = vmatpush.xpose.msra.mxu0 %v415
          %433 = vmatmul.f32.gmra.mxu0 %v412
          %v434 = vpop.f32.mrf.mxu0
          %v435 = vadd.f32 0.0, %v434
          %436 = vdwg.mxu0
          %v437 = vmul.f32 %v435, 0.17677669
          %vm438 = vcmask 64512
          %v439 = vsel %vm438, %v437, -inf
          %440 = vmax.xlane.f32.xlu0 %v439
          %v441 = vpop.xlane.xlu0 %440
          %v442 = vsub.f32 %v437, %v441
          %v443 = vmul.f32 %v442, 1.442695
          %v444 = vpow.pop %v443
          %v445 = vsel %vm438, %v444, 0.0
          %446 = vadd.xlane.f32.xlu0 %v445
          %v447 = vpop.xlane.xlu0 %446
          %v448 = vrcp.pop %v447
          %v449 = vmul.f32 %v447, %v448
          %v450 = vsub.f32 2.0, %v449
          %v451 = vmul.f32 %v448, %v450
          %v452 = vmul.f32 %v444, %v451
          %v454 = vsel %vm438, %v452, 0
          %456 = vmatpush.msra.mxu0 0.0
          %457 = vmatpush.msra.mxu0 0.0
          %458 = vmatpush.msra.mxu0 0.0
          %459 = vmatpush.msra.mxu0 0.0
          %460 = vmatpush.msra.mxu0 0.0
          %461 = vmatpush.msra.mxu0 0.0
          %462 = vmatpush.msra.mxu0 0.0
          %463 = vmatpush.msra.mxu0 0.0
          %464 = vmatpush.msra.mxu0 0.0
          %465 = vmatpush.msra.mxu0 0.0
          %466 = vmatpush.msra.mxu0 0.0
          %467 = vmatpush.msra.mxu0 0.0
          %468 = vmatpush.msra.mxu0 0.0
          %469 = vmatpush.msra.mxu0 0.0
          %470 = vmatpush.msra.mxu0 0.0
          %471 = vmatpush.msra.mxu0 %v409
          %472 = vmatmul.f32.gmra.mxu0 %v454
          %v473 = vpop.f32.mrf.mxu0
          %v474 = vadd.f32 0.0, %v473
          %475 = vdwg.mxu0
          %v476 = vld [vmem:[%s322] sm:$0xff]
          %v477 = vld [vmem:[%s322 + $0x8] sm:$0xff]
          %v478 = vld [vmem:[%s322 + $0x10] sm:$0xff]
          %v479 = vld [vmem:[%s322 + $0x18] sm:$0xff]
          %v481 = vsel %vm337, %v474, 0
          %483 = vmatpush.msra.mxu0 0.0
          %484 = vmatpush.msra.mxu0 0.0
          %485 = vmatpush.msra.mxu0 0.0
          %486 = vmatpush.msra.mxu0 0.0
          %487 = vmatpush.msra.mxu0 0.0
          %488 = vmatpush.msra.mxu0 0.0
          %489 = vmatpush.msra.mxu0 0.0
          %490 = vmatpush.msra.mxu0 0.0
          %491 = vmatpush.msra.mxu0 0.0
          %492 = vmatpush.msra.mxu0 0.0
          %493 = vmatpush.msra.mxu0 0.0
          %494 = vmatpush.msra.mxu0 0.0
          %495 = vmatpush.msra.mxu0 %v479
          %496 = vmatpush.msra.mxu0 %v478
          %497 = vmatpush.msra.mxu0 %v477
          %498 = vmatpush.msra.mxu0 %v476
          %499 = vmatmul.f32.gmra.mxu0 %v481
          %v500 = vpop.f32.mrf.mxu0
          %v501 = vadd.f32 0.0, %v500
          %502 = vdwg.mxu0
          %v503 = vadd.f32 %v328, %v501
          %504 = vst.msk [vmem:[%s327] sm:$0xff] %vm337, %v503
          %v505 = vpack.c.bf16 %v452, %v452
          %vm506 = vcmask 60416
          %507 = vst.msk [vmem:[%s295] sm:$0xf] %vm506, %v505
        $region36: #{encoder_stack_forward.1} parent=31 // pred_fallthru
          _
        %p508 = scmp.eq.s32.totalorder %s29, 1
        // Predicated region
        $region37: #{encoder_stack_forward.1} parent=31 // pred_check
          %p509 = pneg %p508
        $region38: #{encoder_stack_forward.1} parent=31 // pred_check_branch
          %511 = sbr.rel (%p509) target = $region40
        $region39: #{encoder_stack_forward.1} parent=31 // pred_region
          %v512 = vld [vmem:[%s317] sm:$0xff]
          %v513 = vld [vmem:[%s317 + $0x8] sm:$0xff]
          %v514 = vld [vmem:[%s317 + $0x10] sm:$0xff]
          %v515 = vld [vmem:[%s317 + $0x18] sm:$0xff]
          %v517 = vrot.slane %v328, 4
          %vm518 = vcmask 261120
          %v519 = vsel %vm518, %v517, 0
          %521 = vmatpush.msra.mxu0 0.0
          %522 = vmatpush.msra.mxu0 0.0
          %523 = vmatpush.msra.mxu0 0.0
          %524 = vmatpush.msra.mxu0 0.0
          %525 = vmatpush.msra.mxu0 0.0
          %526 = vmatpush.msra.mxu0 0.0
          %527 = vmatpush.msra.mxu0 0.0
          %528 = vmatpush.msra.mxu0 0.0
          %529 = vmatpush.msra.mxu0 0.0
          %530 = vmatpush.msra.mxu0 0.0
          %531 = vmatpush.msra.mxu0 0.0
          %532 = vmatpush.msra.mxu0 0.0
          %533 = vmatpush.msra.mxu0 %v515
          %534 = vmatpush.msra.mxu0 %v514
          %535 = vmatpush.msra.mxu0 %v513
          %536 = vmatpush.msra.mxu0 %v512
          %537 = vmatmul.f32.gmra.mxu0 %v519
          %v538 = vpop.f32.mrf.mxu0
          %v539 = vadd.f32 0.0, %v538
          %540 = vdwg.mxu0
          %s541 = scalar_lea.vmem %s317, 32
          %v542 = vld [vmem:[%s541] sm:$0xff]
          %v543 = vld [vmem:[%s541 + $0x8] sm:$0xff]
          %v544 = vld [vmem:[%s541 + $0x10] sm:$0xff]
          %v545 = vld [vmem:[%s541 + $0x18] sm:$0xff]
          %546 = vmatpush.msra.mxu0 0.0
          %547 = vmatpush.msra.mxu0 0.0
          %548 = vmatpush.msra.mxu0 0.0
          %549 = vmatpush.msra.mxu0 0.0
          %550 = vmatpush.msra.mxu0 0.0
          %551 = vmatpush.msra.mxu0 0.0
          %552 = vmatpush.msra.mxu0 0.0
          %553 = vmatpush.msra.mxu0 0.0
          %554 = vmatpush.msra.mxu0 0.0
          %555 = vmatpush.msra.mxu0 0.0
          %556 = vmatpush.msra.mxu0 0.0
          %557 = vmatpush.msra.mxu0 0.0
          %558 = vmatpush.msra.mxu0 %v545
          %559 = vmatpush.msra.mxu0 %v544
          %560 = vmatpush.msra.mxu0 %v543
          %561 = vmatpush.msra.mxu0 %v542
          %562 = vmatmul.f32.gmra.mxu0 %v519
          %v563 = vpop.f32.mrf.mxu0
          %v564 = vadd.f32 0.0, %v563
          %565 = vdwg.mxu0
          %s566 = scalar_lea.vmem %s317, 64
          %v567 = vld [vmem:[%s566] sm:$0xff]
          %v568 = vld [vmem:[%s566 + $0x8] sm:$0xff]
          %v569 = vld [vmem:[%s566 + $0x10] sm:$0xff]
          %v570 = vld [vmem:[%s566 + $0x18] sm:$0xff]
          %571 = vmatpush.msra.mxu0 0.0
          %572 = vmatpush.msra.mxu0 0.0
          %573 = vmatpush.msra.mxu0 0.0
          %574 = vmatpush.msra.mxu0 0.0
          %575 = vmatpush.msra.mxu0 0.0
          %576 = vmatpush.msra.mxu0 0.0
          %577 = vmatpush.msra.mxu0 0.0
          %578 = vmatpush.msra.mxu0 0.0
          %579 = vmatpush.msra.mxu0 0.0
          %580 = vmatpush.msra.mxu0 0.0
          %581 = vmatpush.msra.mxu0 0.0
          %582 = vmatpush.msra.mxu0 0.0
          %583 = vmatpush.msra.mxu0 %v570
          %584 = vmatpush.msra.mxu0 %v569
          %585 = vmatpush.msra.mxu0 %v568
          %586 = vmatpush.msra.mxu0 %v567
          %587 = vmatmul.f32.gmra.mxu0 %v519
          %v588 = vpop.f32.mrf.mxu0
          %v589 = vadd.f32 0.0, %v588
          %590 = vdwg.mxu0
          %v592 = vsel %vm518, %v539, 0
          %v595 = vsel %vm518, %v564, 0
          %597 = vmatpush.xpose.msra.mxu0 0.0
          %598 = vmatpush.xpose.msra.mxu0 0.0
          %599 = vmatpush.xpose.msra.mxu0 0.0
          %600 = vmatpush.xpose.msra.mxu0 0.0
          %601 = vmatpush.xpose.msra.mxu0 0.0
          %602 = vmatpush.xpose.msra.mxu0 0.0
          %603 = vmatpush.xpose.msra.mxu0 0.0
          %604 = vmatpush.xpose.msra.mxu0 0.0
          %605 = vmatpush.xpose.msra.mxu0 0.0
          %606 = vmatpush.xpose.msra.mxu0 0.0
          %607 = vmatpush.xpose.msra.mxu0 0.0
          %608 = vmatpush.xpose.msra.mxu0 0.0
          %609 = vmatpush.xpose.msra.mxu0 0.0
          %610 = vmatpush.xpose.msra.mxu0 0.0
          %611 = vmatpush.xpose.msra.mxu0 0.0
          %612 = vmatpush.xpose.msra.mxu0 %v595
          %613 = vmatmul.f32.gmra.mxu0 %v592
          %v614 = vpop.f32.mrf.mxu0
          %v615 = vadd.f32 0.0, %v614
          %616 = vdwg.mxu0
          %v617 = vmul.f32 %v615, 0.17677669
          %vm618 = vcmask 27648
          %v619 = vsel %vm618, %v617, -inf
          %620 = vmax.xlane.f32.xlu0 %v619
          %v621 = vpop.xlane.xlu0 %620
          %v622 = vsub.f32 %v617, %v621
          %v623 = vmul.f32 %v622, 1.442695
          %v624 = vpow.pop %v623
          %v625 = vsel %vm618, %v624, 0.0
          %626 = vadd.xlane.f32.xlu0 %v625
          %v627 = vpop.xlane.xlu0 %626
          %v628 = vrcp.pop %v627
          %v629 = vmul.f32 %v627, %v628
          %v630 = vsub.f32 2.0, %v629
          %v631 = vmul.f32 %v628, %v630
          %v632 = vmul.f32 %v624, %v631
          %vm633 = vcmask 31744
          %v635 = vsel %vm633, %v632, 0
          %vm637 = vcmask 1043456
          %v639 = vsel %vm637, %v589, 0
          %641 = vmatpush.msra.mxu0 0.0
          %642 = vmatpush.msra.mxu0 0.0
          %643 = vmatpush.msra.mxu0 0.0
          %644 = vmatpush.msra.mxu0 0.0
          %645 = vmatpush.msra.mxu0 0.0
          %646 = vmatpush.msra.mxu0 0.0
          %647 = vmatpush.msra.mxu0 0.0
          %648 = vmatpush.msra.mxu0 0.0
          %649 = vmatpush.msra.mxu0 0.0
          %650 = vmatpush.msra.mxu0 0.0
          %651 = vmatpush.msra.mxu0 0.0
          %652 = vmatpush.msra.mxu0 0.0
          %653 = vmatpush.msra.mxu0 0.0
          %654 = vmatpush.msra.mxu0 0.0
          %655 = vmatpush.msra.mxu0 0.0
          %656 = vmatpush.msra.mxu0 %v639
          %657 = vmatmul.f32.gmra.mxu0 %v635
          %v658 = vpop.f32.mrf.mxu0
          %v659 = vadd.f32 0.0, %v658
          %660 = vdwg.mxu0
          %v661 = vld [vmem:[%s322] sm:$0xff]
          %v662 = vld [vmem:[%s322 + $0x8] sm:$0xff]
          %v663 = vld [vmem:[%s322 + $0x10] sm:$0xff]
          %v664 = vld [vmem:[%s322 + $0x18] sm:$0xff]
          %v666 = vsel %vm518, %v659, 0
          %668 = vmatpush.msra.mxu0 0.0
          %669 = vmatpush.msra.mxu0 0.0
          %670 = vmatpush.msra.mxu0 0.0
          %671 = vmatpush.msra.mxu0 0.0
          %672 = vmatpush.msra.mxu0 0.0
          %673 = vmatpush.msra.mxu0 0.0
          %674 = vmatpush.msra.mxu0 0.0
          %675 = vmatpush.msra.mxu0 0.0
          %676 = vmatpush.msra.mxu0 0.0
          %677 = vmatpush.msra.mxu0 0.0
          %678 = vmatpush.msra.mxu0 0.0
          %679 = vmatpush.msra.mxu0 0.0
          %680 = vmatpush.msra.mxu0 %v664
          %681 = vmatpush.msra.mxu0 %v663
          %682 = vmatpush.msra.mxu0 %v662
          %683 = vmatpush.msra.mxu0 %v661
          %684 = vmatmul.f32.gmra.mxu0 %v666
          %v685 = vpop.f32.mrf.mxu0
          %v686 = vadd.f32 0.0, %v685
          %687 = vdwg.mxu0
          %v689 = vrot.slane %v686, 4
          %v691 = vadd.f32 %v328, %v689
          %vm692 = vcmask 261124
          %693 = vst.msk [vmem:[%s327 + $0x4] sm:$0xf0] %vm692, %v691
          %v694 = vpack.c.bf16 %v632, %v632
          %vm695 = vcmask 25600
          %696 = vst.msk [vmem:[%s302] sm:$0x3] %vm695, %v694
        $region40: #{encoder_stack_forward.1} parent=31 // pred_fallthru
          _
        %p697 = scmp.eq.s32.totalorder %s29, 2
        // Predicated region
        $region41: #{encoder_stack_forward.1} parent=31 // pred_check
          %p698 = pneg %p697
        $region42: #{encoder_stack_forward.1} parent=31 // pred_check_branch
          %700 = sbr.rel (%p698) target = $region44
        $region43: #{encoder_stack_forward.1} parent=31 // pred_region
          %v701 = vld [vmem:[%s317] sm:$0xff]
          %v702 = vld [vmem:[%s317 + $0x8] sm:$0xff]
          %v703 = vld [vmem:[%s317 + $0x10] sm:$0xff]
          %v704 = vld [vmem:[%s317 + $0x18] sm:$0xff]
          %v706 = vrot.slane %v328, 6
          %vm707 = vcmask 261120
          %v708 = vsel %vm707, %v706, 0
          %710 = vmatpush.msra.mxu0 0.0
          %711 = vmatpush.msra.mxu0 0.0
          %712 = vmatpush.msra.mxu0 0.0
          %713 = vmatpush.msra.mxu0 0.0
          %714 = vmatpush.msra.mxu0 0.0
          %715 = vmatpush.msra.mxu0 0.0
          %716 = vmatpush.msra.mxu0 0.0
          %717 = vmatpush.msra.mxu0 0.0
          %718 = vmatpush.msra.mxu0 0.0
          %719 = vmatpush.msra.mxu0 0.0
          %720 = vmatpush.msra.mxu0 0.0
          %721 = vmatpush.msra.mxu0 0.0
          %722 = vmatpush.msra.mxu0 %v704
          %723 = vmatpush.msra.mxu0 %v703
          %724 = vmatpush.msra.mxu0 %v702
          %725 = vmatpush.msra.mxu0 %v701
          %726 = vmatmul.f32.gmra.mxu0 %v708
          %v727 = vpop.f32.mrf.mxu0
          %v728 = vadd.f32 0.0, %v727
          %729 = vdwg.mxu0
          %s730 = scalar_lea.vmem %s317, 32
          %v731 = vld [vmem:[%s730] sm:$0xff]
          %v732 = vld [vmem:[%s730 + $0x8] sm:$0xff]
          %v733 = vld [vmem:[%s730 + $0x10] sm:$0xff]
          %v734 = vld [vmem:[%s730 + $0x18] sm:$0xff]
          %735 = vmatpush.msra.mxu0 0.0
          %736 = vmatpush.msra.mxu0 0.0
          %737 = vmatpush.msra.mxu0 0.0
          %738 = vmatpush.msra.mxu0 0.0
          %739 = vmatpush.msra.mxu0 0.0
          %740 = vmatpush.msra.mxu0 0.0
          %741 = vmatpush.msra.mxu0 0.0
          %742 = vmatpush.msra.mxu0 0.0
          %743 = vmatpush.msra.mxu0 0.0
          %744 = vmatpush.msra.mxu0 0.0
          %745 = vmatpush.msra.mxu0 0.0
          %746 = vmatpush.msra.mxu0 0.0
          %747 = vmatpush.msra.mxu0 %v734
          %748 = vmatpush.msra.mxu0 %v733
          %749 = vmatpush.msra.mxu0 %v732
          %750 = vmatpush.msra.mxu0 %v731
          %751 = vmatmul.f32.gmra.mxu0 %v708
          %v752 = vpop.f32.mrf.mxu0
          %v753 = vadd.f32 0.0, %v752
          %754 = vdwg.mxu0
          %s755 = scalar_lea.vmem %s317, 64
          %v756 = vld [vmem:[%s755] sm:$0xff]
          %v757 = vld [vmem:[%s755 + $0x8] sm:$0xff]
          %v758 = vld [vmem:[%s755 + $0x10] sm:$0xff]
          %v759 = vld [vmem:[%s755 + $0x18] sm:$0xff]
          %760 = vmatpush.msra.mxu0 0.0
          %761 = vmatpush.msra.mxu0 0.0
          %762 = vmatpush.msra.mxu0 0.0
          %763 = vmatpush.msra.mxu0 0.0
          %764 = vmatpush.msra.mxu0 0.0
          %765 = vmatpush.msra.mxu0 0.0
          %766 = vmatpush.msra.mxu0 0.0
          %767 = vmatpush.msra.mxu0 0.0
          %768 = vmatpush.msra.mxu0 0.0
          %769 = vmatpush.msra.mxu0 0.0
          %770 = vmatpush.msra.mxu0 0.0
          %771 = vmatpush.msra.mxu0 0.0
          %772 = vmatpush.msra.mxu0 %v759
          %773 = vmatpush.msra.mxu0 %v758
          %774 = vmatpush.msra.mxu0 %v757
          %775 = vmatpush.msra.mxu0 %v756
          %776 = vmatmul.f32.gmra.mxu0 %v708
          %v777 = vpop.f32.mrf.mxu0
          %v778 = vadd.f32 0.0, %v777
          %779 = vdwg.mxu0
          %v781 = vsel %vm707, %v728, 0
          %v784 = vsel %vm707, %v753, 0
          %786 = vmatpush.xpose.msra.mxu0 0.0
          %787 = vmatpush.xpose.msra.mxu0 0.0
          %788 = vmatpush.xpose.msra.mxu0 0.0
          %789 = vmatpush.xpose.msra.mxu0 0.0
          %790 = vmatpush.xpose.msra.mxu0 0.0
          %791 = vmatpush.xpose.msra.mxu0 0.0
          %792 = vmatpush.xpose.msra.mxu0 0.0
          %793 = vmatpush.xpose.msra.mxu0 0.0
          %794 = vmatpush.xpose.msra.mxu0 0.0
          %795 = vmatpush.xpose.msra.mxu0 0.0
          %796 = vmatpush.xpose.msra.mxu0 0.0
          %797 = vmatpush.xpose.msra.mxu0 0.0
          %798 = vmatpush.xpose.msra.mxu0 0.0
          %799 = vmatpush.xpose.msra.mxu0 0.0
          %800 = vmatpush.xpose.msra.mxu0 0.0
          %801 = vmatpush.xpose.msra.mxu0 %v784
          %802 = vmatmul.f32.gmra.mxu0 %v781
          %v803 = vpop.f32.mrf.mxu0
          %v804 = vadd.f32 0.0, %v803
          %805 = vdwg.mxu0
          %v806 = vmul.f32 %v804, 0.17677669
          %vm807 = vcmask 9216
          %v808 = vsel %vm807, %v806, -inf
          %809 = vmax.xlane.f32.xlu0 %v808
          %v810 = vpop.xlane.xlu0 %809
          %v811 = vsub.f32 %v806, %v810
          %v812 = vmul.f32 %v811, 1.442695
          %v813 = vpow.pop %v812
          %v814 = vsel %vm807, %v813, 0.0
          %815 = vadd.xlane.f32.xlu0 %v814
          %v816 = vpop.xlane.xlu0 %815
          %v817 = vrcp.pop %v816
          %v818 = vmul.f32 %v816, %v817
          %v819 = vsub.f32 2.0, %v818
          %v820 = vmul.f32 %v817, %v819
          %v821 = vmul.f32 %v813, %v820
          %vm822 = vcmask 15360
          %v824 = vsel %vm822, %v821, 0
          %vm826 = vcmask 1041408
          %v828 = vsel %vm826, %v778, 0
          %830 = vmatpush.msra.mxu0 0.0
          %831 = vmatpush.msra.mxu0 0.0
          %832 = vmatpush.msra.mxu0 0.0
          %833 = vmatpush.msra.mxu0 0.0
          %834 = vmatpush.msra.mxu0 0.0
          %835 = vmatpush.msra.mxu0 0.0
          %836 = vmatpush.msra.mxu0 0.0
          %837 = vmatpush.msra.mxu0 0.0
          %838 = vmatpush.msra.mxu0 0.0
          %839 = vmatpush.msra.mxu0 0.0
          %840 = vmatpush.msra.mxu0 0.0
          %841 = vmatpush.msra.mxu0 0.0
          %842 = vmatpush.msra.mxu0 0.0
          %843 = vmatpush.msra.mxu0 0.0
          %844 = vmatpush.msra.mxu0 0.0
          %845 = vmatpush.msra.mxu0 %v828
          %846 = vmatmul.f32.gmra.mxu0 %v824
          %v847 = vpop.f32.mrf.mxu0
          %v848 = vadd.f32 0.0, %v847
          %849 = vdwg.mxu0
          %v850 = vld [vmem:[%s322] sm:$0xff]
          %v851 = vld [vmem:[%s322 + $0x8] sm:$0xff]
          %v852 = vld [vmem:[%s322 + $0x10] sm:$0xff]
          %v853 = vld [vmem:[%s322 + $0x18] sm:$0xff]
          %v855 = vsel %vm707, %v848, 0
          %857 = vmatpush.msra.mxu0 0.0
          %858 = vmatpush.msra.mxu0 0.0
          %859 = vmatpush.msra.mxu0 0.0
          %860 = vmatpush.msra.mxu0 0.0
          %861 = vmatpush.msra.mxu0 0.0
          %862 = vmatpush.msra.mxu0 0.0
          %863 = vmatpush.msra.mxu0 0.0
          %864 = vmatpush.msra.mxu0 0.0
          %865 = vmatpush.msra.mxu0 0.0
          %866 = vmatpush.msra.mxu0 0.0
          %867 = vmatpush.msra.mxu0 0.0
          %868 = vmatpush.msra.mxu0 0.0
          %869 = vmatpush.msra.mxu0 %v853
          %870 = vmatpush.msra.mxu0 %v852
          %871 = vmatpush.msra.mxu0 %v851
          %872 = vmatpush.msra.mxu0 %v850
          %873 = vmatmul.f32.gmra.mxu0 %v855
          %v874 = vpop.f32.mrf.mxu0
          %v875 = vadd.f32 0.0, %v874
          %876 = vdwg.mxu0
          %v878 = vrot.slane %v875, 2
          %v880 = vadd.f32 %v328, %v878
          %vm881 = vcmask 261126
          %882 = vst.msk [vmem:[%s327 + $0x6] sm:$0xc0] %vm881, %v880
          %v883 = vpack.c.bf16 %v821, %v821
          %vm884 = vcmask 8192
          %885 = vst.msk [vmem:[%s308] sm:$0x1] %vm884, %v883
        $region44: #{encoder_stack_forward.1} parent=31 // pred_fallthru
          _
        %p886 = scmp.lt.s32.totalorder %s28, 1
        %s887 = scalar_select %p886, %s28, 1
        %s888 = smul.addr %s887, 2
        %s889 = smul.addr %s888, 8
        %s890 = scalar_lea.vmem %s3, %s889
        %s891 = sand.u32 %s148, 1
        %s892 = scalar_lea.sflag [#allocation3], %s891
        %s893 = sand.u32 %s148, 1
        %s894 = smul.addr %s893, 4
        %s895 = scalar_lea.vmem [#allocation2], %s894
        %s896 = sand.u32 %s24, 1
        %s897 = scalar_lea.sflag [#allocation5], %s896
        %s898 = sand.u32 %s174, 1
        %s899 = smul.addr %s898, 2
        %s900 = scalar_lea.vmem [#allocation4], %s899
        %s901 = sand.u32 %s24, 1
        %s902 = scalar_lea.sflag [#allocation5], %s901
        %s903 = sand.u32 %s200, 1
        %s904 = scalar_lea.vmem [#allocation6], %s903
        // Predicated region
        $region45: #{encoder_stack_forward.1} parent=31 // pred_check
          %p905 = pneg %p132
        $region46: #{encoder_stack_forward.1} parent=31 // pred_check_branch
          %907 = sbr.rel (%p905) target = $region48
        $region47: #{encoder_stack_forward.1} parent=31 // pred_region
          _
        $region48: #{encoder_stack_forward.1} parent=31 // pred_fallthru
          _
        // Predicated region
        $region49: #{encoder_stack_forward.1} parent=31 // pred_check
          %p908 = pneg %p158
        $region50: #{encoder_stack_forward.1} parent=31 // pred_check_branch
          %910 = sbr.rel (%p908) target = $region52
        $region51: #{encoder_stack_forward.1} parent=31 // pred_region
          %912 = vsyncadd %s892, 0
          %s913 = smul.addr %s28, 4
          %s914 = scalar_lea.hbm %s4, %s913
          %s916 = sshll.u32 %s895, 4
          %s917 = int_to_ptr.vmem [resolvable:$true] %s916
          %s918 = sshll.u32 %s914, 4
          %s919 = int_to_ptr.hbm [resolvable:$true] %s918
          %921 = dma.vmem_to_hbm [thread:$0]  %s917, 64, %s919, %s892
        $region52: #{encoder_stack_forward.1} parent=31 // pred_fallthru
          _
        // Predicated region
        $region53: #{encoder_stack_forward.1} parent=31 // pred_check
          %p922 = pneg %p184
        $region54: #{encoder_stack_forward.1} parent=31 // pred_check_branch
          %924 = sbr.rel (%p922) target = $region56
        $region55: #{encoder_stack_forward.1} parent=31 // pred_region
          %926 = vsyncadd %s897, 0
          %s927 = smul.addr %s28, 2
          %s928 = scalar_lea.hbm %s5, %s927
          %s930 = sshll.u32 %s900, 4
          %s931 = int_to_ptr.vmem [resolvable:$true] %s930
          %s932 = sshll.u32 %s928, 4
          %s933 = int_to_ptr.hbm [resolvable:$true] %s932
          %935 = dma.vmem_to_hbm [thread:$0]  %s931, 32, %s933, %s897
        $region56: #{encoder_stack_forward.1} parent=31 // pred_fallthru
          _
        // Predicated region
        $region57: #{encoder_stack_forward.1} parent=31 // pred_check
          %p936 = pneg %p210
        $region58: #{encoder_stack_forward.1} parent=31 // pred_check_branch
          %938 = sbr.rel (%p936) target = $region60
        $region59: #{encoder_stack_forward.1} parent=31 // pred_region
          %940 = vsyncadd %s902, 0
          %s941 = scalar_lea.hbm %s6, %s28
          %s943 = sshll.u32 %s904, 4
          %s944 = int_to_ptr.vmem [resolvable:$true] %s943
          %s945 = sshll.u32 %s941, 4
          %s946 = int_to_ptr.hbm [resolvable:$true] %s945
          %948 = dma.vmem_to_hbm [thread:$0]  %s944, 16, %s946, %s902
        $region60: #{encoder_stack_forward.1} parent=31 // pred_fallthru
          _
      $region32: #{encoder_stack_forward.1} parent=5 // pred_fallthru
        _
      %p949 = scmp.le.s32.totalorder 2, %s19
      // Predicated region
      $region61: #{encoder_stack_forward.1} parent=5 // pred_check
        %p950 = pneg %p949
      $region62: #{encoder_stack_forward.1} parent=5 // pred_check_branch
        %952 = sbr.rel (%p950) target = $region64
      $region63: #{encoder_stack_forward.1} parent=5 // pred_region
        %s953 = ssub.s32 %s19, 2
        // Predicated region
        $region65: #{encoder_stack_forward.1} parent=63 // pred_check
          %p954 = pneg %p138
        $region66: #{encoder_stack_forward.1} parent=63 // pred_check_branch
          %956 = sbr.rel (%p954) target = $region68
        $region67: #{encoder_stack_forward.1} parent=63 // pred_region
          %p957 = scmp.lt.s32.totalorder %s30, 1
          %s958 = scalar_select %p957, %s30, 1
          %s959 = smul.addr %s958, 2
          %s960 = smul.addr %s959, 8
          %s961 = scalar_lea.vmem %s3, %s960
        $region68: #{encoder_stack_forward.1} parent=63 // pred_fallthru
          _
        // Predicated region
        $region69: #{encoder_stack_forward.1} parent=63 // pred_check
          %p962 = pneg %p164
        $region70: #{encoder_stack_forward.1} parent=63 // pred_check_branch
          %964 = sbr.rel (%p962) target = $region72
        $region71: #{encoder_stack_forward.1} parent=63 // pred_region
          %s965 = sand.u32 %s149, 1
          %s966 = scalar_lea.sflag [#allocation3], %s965
          %s967 = sand.u32 %s149, 1
          %s968 = smul.addr %s967, 4
          %s969 = scalar_lea.vmem [#allocation2], %s968
          %971 = dma.done %s966, 64
        $region72: #{encoder_stack_forward.1} parent=63 // pred_fallthru
          _
        // Predicated region
        $region73: #{encoder_stack_forward.1} parent=63 // pred_check
          %p972 = pneg %p190
        $region74: #{encoder_stack_forward.1} parent=63 // pred_check_branch
          %974 = sbr.rel (%p972) target = $region76
        $region75: #{encoder_stack_forward.1} parent=63 // pred_region
          %s975 = sand.u32 %s25, 1
          %s976 = scalar_lea.sflag [#allocation5], %s975
          %s977 = sand.u32 %s175, 1
          %s978 = smul.addr %s977, 2
          %s979 = scalar_lea.vmem [#allocation4], %s978
          %981 = dma.done %s976, 32
        $region76: #{encoder_stack_forward.1} parent=63 // pred_fallthru
          _
        // Predicated region
        $region77: #{encoder_stack_forward.1} parent=63 // pred_check
          %p982 = pneg %p216
        $region78: #{encoder_stack_forward.1} parent=63 // pred_check_branch
          %984 = sbr.rel (%p982) target = $region80
        $region79: #{encoder_stack_forward.1} parent=63 // pred_region
          %s985 = sand.u32 %s25, 1
          %s986 = scalar_lea.sflag [#allocation5], %s985
          %s987 = sand.u32 %s201, 1
          %s988 = scalar_lea.vmem [#allocation6], %s987
          %990 = dma.done %s986, 16
        $region80: #{encoder_stack_forward.1} parent=63 // pred_fallthru
          _
      $region64: #{encoder_stack_forward.1} parent=5 // pred_fallthru
        _
    $region6: #{encoder_stack_forward.1} parent=1 // loop_footer
      %s23 = sadd.s32 1, %s19
    $region7: #{encoder_stack_forward.1} parent=1 // loop_footer_branch
      %18 = sbr.rel target = $region3
    $region8: #{encoder_stack_forward.1} parent=1 // loop_exit
      _
    %991 = vsyncpa [#allocation3], 1
    %s992 = scalar_lea.sflag [#allocation3], 1
    %993 = vsyncpa %s992, 1
    %994 = vsyncpa [#allocation5], 1
    %s995 = scalar_lea.sflag [#allocation5], 1
    %996 = vsyncpa %s995, 1

</llo_original>
